<compile_context>
chip_gen: v6e
topology: v6e:2x2x1
jax: 0.10.0
libtpu: 0.0.40
codegen_flags: <defaults>
</compile_context>

<pallas_src>
import jax
import jax.numpy as jnp
from jax.experimental import pallas as pl
from jax.experimental.pallas import tpu as pltpu


def _round_up(x: int, m: int) -> int:
    return ((x + m - 1) // m) * m


def _gcn_matmul_kernel(a_ref, p_ref, o_ref, acc_ref):
    # a_ref:   (tile_m, tile_k) bf16 tile of A_hat = I + A (exact small counts)
    # p_ref:   (tile_k, f_pad)  bf16 tile of P = H @ W
    # o_ref:   (tile_m, f_pad)  f32 output tile (lane-dense, unmasked vst)
    # acc_ref: (tile_m, f_pad)  f32 accumulator, resident across the K axis
    k = pl.program_id(1)

    @pl.when(k == 0)
    def _():
        acc_ref[...] = jnp.zeros_like(acc_ref)

    # Native bf16 x bf16 MXU matmul with f32 accumulation.
    acc_ref[...] += jnp.dot(a_ref[...], p_ref[...],
                            preferred_element_type=jnp.float32)

    @pl.when(k == pl.num_programs(1) - 1)
    def _():
        o_ref[...] = jnp.maximum(acc_ref[...], 0.0).astype(o_ref.dtype)


def _pick_tile_k(k_pad: int) -> int:
    # Largest multiple of 128 that divides k_pad and is <= 512.
    for cand in (512, 384, 256, 128):
        if k_pad % cand == 0:
            return cand
    return 128


def gcn_layer_forward(H, edge_index, W, *, tile_m=None, tile_k=None):
    """GCNLayer.forward: relu((H + scatter_add(H[src], dst)) @ W)."""
    N, in_features = H.shape
    out_features = W.shape[1]

    # ---- glue (plain JAX) --------------------------------------------------
    # Cheap (N, in) @ (in, out) matmul first, then cast to bf16 so the Pallas
    # kernel runs the native bf16 MXU path on the big O(N^2) matmul.
    P = jnp.dot(H, W, preferred_element_type=jnp.float32).astype(jnp.bfloat16)

    # Tiling / padding.  Rows pad to tile_m; columns (contraction) pad only to
    # a multiple of 128 so the dominant A_hat HBM stream stays near-minimal.
    if tile_m is None:
        tile_m = 128 if N <= 1024 else 256
    m_pad = _round_up(N, tile_m)
    k_pad = _round_up(N, 128)
    if tile_k is None:
        tile_k = _pick_tile_k(k_pad)
    f_pad = _round_up(out_features, 128)

    # A_hat = I + A built directly at padded shape, in bf16, in ONE scatter.
    # (bf16 counts are exact for multiplicities <= 256.)
    src = edge_index[0]
    dst = edge_index[1]
    diag = jnp.arange(N, dtype=dst.dtype)
    rows = jnp.concatenate([dst, diag])
    cols = jnp.concatenate([src, diag])
    A_hat_p = (
        jnp.zeros((m_pad, k_pad), jnp.bfloat16)
        .at[rows, cols]
        .add(jnp.ones(rows.shape, jnp.bfloat16))
    )

    P_p = jnp.pad(P, ((0, k_pad - N), (0, f_pad - out_features)))

    grid_m = m_pad // tile_m
    grid_k = k_pad // tile_k

    cost = pl.CostEstimate(
        flops=2 * m_pad * k_pad * f_pad,
        transcendentals=0,
        bytes_accessed=(A_hat_p.size * 2            # A_hat streamed once
                        + grid_m * k_pad * f_pad * 2  # P re-read per row tile
                        + m_pad * f_pad * 4),         # output write
    )

    out_p = pl.pallas_call(
        _gcn_matmul_kernel,
        out_shape=jax.ShapeDtypeStruct((m_pad, f_pad), jnp.float32),
        grid_spec=pltpu.PrefetchScalarGridSpec(
            num_scalar_prefetch=0,
            grid=(grid_m, grid_k),
            in_specs=[
                pl.BlockSpec((tile_m, tile_k), lambda i, k: (i, k)),  # A_hat
                pl.BlockSpec((tile_k, f_pad), lambda i, k: (k, 0)),   # P
            ],
            out_specs=pl.BlockSpec((tile_m, f_pad), lambda i, k: (i, 0)),
            scratch_shapes=[pltpu.VMEM((tile_m, f_pad), jnp.float32)],
        ),
        compiler_params=pltpu.CompilerParams(
            # Row tiles independent (megacore-shardable); K is a reduction.
            dimension_semantics=("parallel", "arbitrary"),
        ),
        cost_estimate=cost,
    )(A_hat_p, P_p)

    # Strip row/lane padding back to the module's output shape.
    return out_p[:N, :out_features].astype(H.dtype)


if __name__ == "__main__":
    # Small, deterministic example consistent with the module's forward:
    #   H: (num_nodes, in_features), edge_index: (2, num_edges)
    num_nodes = 256
    in_features = 32
    out_features = 16
    num_edges = 1024

    key = jax.random.PRNGKey(0)
    k_h, k_src, k_dst, k_w = jax.random.split(key, 4)

    H = jax.random.normal(k_h, (num_nodes, in_features), dtype=jnp.float32)
    edge_index = jnp.stack(
        [
            jax.random.randint(k_src, (num_edges,), 0, num_nodes),
            jax.random.randint(k_dst, (num_edges,), 0, num_nodes),
        ],
        axis=0,
    )

    # kaiming_normal_ on a (in_features, out_features) tensor:
    # PyTorch fan_in = tensor.size(1) = out_features, gain = sqrt(2)
    std = (2.0 / out_features) ** 0.5
    W = std * jax.random.normal(k_w, (in_features, out_features), dtype=jnp.float32)

    out = gcn_layer_forward(H, edge_index, W)
    jax.block_until_ready(out)

    # Reference check in plain JAX (same semantics as torch_scatter.scatter_add).
    new_H = jnp.zeros_like(H).at[edge_index[1]].add(H[edge_index[0]])
    ref = jnp.maximum((H + new_H) @ W, 0.0)
    assert out.shape == ref.shape
    # P is streamed in bf16 for the native MXU path -> ~2^-8 relative error on
    # the activations; tolerance set accordingly (A_hat counts remain exact).
    assert jnp.allclose(out, ref, atol=5e-2, rtol=5e-2), float(
        jnp.max(jnp.abs(out - ref))
    )

    print("KERNEL_OK")
</pallas_src>

<mosaic_0001>
module attributes {stable_mosaic.version = 11 : i64} {
  func.func @_gcn_matmul_kernel(%arg0: i32, %arg1: i32, %arg2: memref<128x256xbf16, #tpu.memory_space<vmem>>, %arg3: memref<256x128xbf16, #tpu.memory_space<vmem>>, %arg4: memref<128x128xf32, #tpu.memory_space<vmem>>, %arg5: memref<128x128xf32, #tpu.memory_space<vmem>>) attributes {dimension_semantics = [#tpu.dimension_semantics<parallel>, #tpu.dimension_semantics<arbitrary>], iteration_bounds = array<i64: 2, 1>, scalar_prefetch = 0 : i64, scratch_operands = 1 : i64, tpu.core_type = #tpu.core_type<tc>, window_params = [{transform_indices = @transform_0, window_bounds = array<i64: 128, 256>}, {transform_indices = @transform_1, window_bounds = array<i64: 256, 128>}, {transform_indices = @transform_2, window_bounds = array<i64: 128, 128>}]} {
    %c0_i32 = arith.constant 0 : i32
    %0 = arith.cmpi eq, %arg1, %c0_i32 : i32
    %1 = arith.extui %0 : i1 to i32
    %c0_i32_0 = arith.constant 0 : i32
    %2 = arith.cmpi ne, %1, %c0_i32_0 : i32
    scf.if %2 {
      %cst_10 = arith.constant 0.000000e+00 : f32
      %12 = vector.broadcast %cst_10 : f32 to vector<128x128xf32>
      %c0_11 = arith.constant 0 : index
      %c0_12 = arith.constant 0 : index
      %13 = vector.load %arg5[%c0_11, %c0_12] : memref<128x128xf32, #tpu.memory_space<vmem>>, vector<128x128xf32>
      tpu.vector_store %arg5[%c0_11, %c0_12], %12 {strides = array<i32>} : memref<128x128xf32, #tpu.memory_space<vmem>>, vector<128x128xf32>,
    } else {
    }
    %c0 = arith.constant 0 : index
    %c0_1 = arith.constant 0 : index
    %3 = vector.load %arg5[%c0, %c0_1] : memref<128x128xf32, #tpu.memory_space<vmem>>, vector<128x128xf32>
    %c0_2 = arith.constant 0 : index
    %c0_3 = arith.constant 0 : index
    %4 = vector.load %arg2[%c0_2, %c0_3] : memref<128x256xbf16, #tpu.memory_space<vmem>>, vector<128x256xbf16>
    %c0_4 = arith.constant 0 : index
    %c0_5 = arith.constant 0 : index
    %5 = vector.load %arg3[%c0_4, %c0_5] : memref<256x128xbf16, #tpu.memory_space<vmem>>, vector<256x128xbf16>
    %cst = arith.constant dense<0.000000e+00> : vector<128x128xf32>
    %6 = tpu.matmul %4, %5, %cst {dimension_numbers = #tpu.dot_dimension_numbers<[1], [0], [0], [1], [0, 0, 1, 1], [], []>} : vector<128x256xbf16>, vector<256x128xbf16>, vector<128x128xf32> -> vector<128x128xf32>
    %7 = arith.addf %3, %6 : vector<128x128xf32>
    %c0_6 = arith.constant 0 : index
    %c0_7 = arith.constant 0 : index
    %8 = vector.load %arg5[%c0_6, %c0_7] : memref<128x128xf32, #tpu.memory_space<vmem>>, vector<128x128xf32>
    tpu.vector_store %arg5[%c0_6, %c0_7], %7 {strides = array<i32>} : memref<128x128xf32, #tpu.memory_space<vmem>>, vector<128x128xf32>,
    %c0_i32_8 = arith.constant 0 : i32
    %9 = arith.cmpi eq, %arg1, %c0_i32_8 : i32
    %10 = arith.extui %9 : i1 to i32
    %c0_i32_9 = arith.constant 0 : i32
    %11 = arith.cmpi ne, %10, %c0_i32_9 : i32
    scf.if %11 {
      %c0_10 = arith.constant 0 : index
      %c0_11 = arith.constant 0 : index
      %12 = vector.load %arg5[%c0_10, %c0_11] : memref<128x128xf32, #tpu.memory_space<vmem>>, vector<128x128xf32>
      %cst_12 = arith.constant 0.000000e+00 : f32
      %13 = vector.broadcast %cst_12 : f32 to vector<128x128xf32>
      %14 = arith.maximumf %12, %13 : vector<128x128xf32>
      %c0_13 = arith.constant 0 : index
      %c0_14 = arith.constant 0 : index
      %15 = vector.load %arg4[%c0_13, %c0_14] : memref<128x128xf32, #tpu.memory_space<vmem>>, vector<128x128xf32>
      tpu.vector_store %arg4[%c0_13, %c0_14], %14 {strides = array<i32>} : memref<128x128xf32, #tpu.memory_space<vmem>>, vector<128x128xf32>,
    } else {
    }
    return
  }
  func.func @transform_0(%arg0: i32, %arg1: i32) -> (i32, i32) {
    %c0_i32 = arith.constant 0 : i32
    return %arg0, %arg1 : i32, i32
  }
  func.func @transform_1(%arg0: i32, %arg1: i32) -> (i32, i32) {
    %c0_i32 = arith.constant 0 : i32
    %c0_i32_0 = arith.constant 0 : i32
    return %arg1, %c0_i32 : i32, i32
  }
  func.func @transform_2(%arg0: i32, %arg1: i32) -> (i32, i32) {
    %c0_i32 = arith.constant 0 : i32
    %c0_i32_0 = arith.constant 0 : i32
    return %arg0, %c0_i32 : i32, i32
  }
}

</mosaic_0001>

<llo_original>
// kernel: tpu_custom_call.1
$region0: #{tpu_custom_call.1}
  #allocation0 [shape = 'u32[]', space=smem, size = 0x4, offset = 0x4, fixed_abs, tag = 'smem constant byte address 0x4 - core index']
  #allocation1 [shape = 'u32[144,128]{1,0:T(1,128)}', space=vmem, size = 0x12000, scoped, tag = 'internal scratch']
  #allocation2 [shape = 'f32[128,128]{1,0:T(8,128)}', space=vmem, size = 0x10000, scoped, tag = 'scratch operand']
  %s0 = inlined_call_operand.hbm [shape: bf16[256,256], index: 0, kind: input, shape index: {}]
  %s1 = inlined_call_operand.hbm [shape: bf16[256,128], index: 1, kind: input, shape index: {}]
  %s2 = inlined_call_operand.hbm [shape: f32[256,128], index: 2, kind: output, shape index: {}]
  %s3 = sld [smem:[#allocation0]]
  $region57: #{tpu_custom_call.1} parent=0
    _
  %s5 = ssub.s32 1, %s3
  %s6 = scalar_select 0, %s5, %s3
  $region1: #{tpu_custom_call.1} parent=0
    #allocation3 [shape = 'u8[131072]{0}', space=vmem, size = 0x20000, scoped, tag = 'input window, operand 0']
    #allocation4 [shape = 's32[2]{0}', space=sflag, size = 0x8, scoped, tag = 'scoped memory for tpu_custom_call.1']
    #allocation5 [shape = 's32[2]{0}', space=sflag, size = 0x8, scoped, tag = 'scoped memory for tpu_custom_call.1']
    #allocation6 [shape = 'u8[65536]{0}', space=vmem, size = 0x10000, scoped, tag = 'input window, operand 1, single buffered']
    #allocation7 [shape = 's32[1]{0}', space=sflag, size = 0x4, scoped, tag = 'scoped memory for tpu_custom_call.1']
    #allocation8 [shape = 'u8[131072]{0}', space=vmem, size = 0x20000, scoped, tag = 'output window, operand 0']
    %7 = vsyncpa [#allocation4], 0
    %s8 = scalar_lea.sflag [#allocation4], 1
    %9 = vsyncpa %s8, 0
    %10 = vsyncpa [#allocation7], 0
    %11 = vsyncpa [#allocation5], 0
    %s12 = scalar_lea.sflag [#allocation5], 1
    %13 = vsyncpa %s12, 0
    loop: start=0, step=1, limit=4
    $region2: #{tpu_custom_call.1} parent=1 // loop_pre_header
      _
    $region3: #{tpu_custom_call.1} parent=1 // loop_header
      %s15 = sphi 0, %s19
      %p16 = scmp.ge.s32.totalorder %s15, 4
      %s22 = sphi 0, %s34
      %s23 = sphi 0, %s30
      %s24 = sphi 0, %s22
      %s25 = sphi 0, %s23
      %s26 = sphi 0, %s24
      %s27 = sphi 0, %s25
      %s39 = sphi 0, %s41
      %s42 = sphi 0, %s39
      %s43 = sphi 0, %s42
      %s59 = sphi 0, %s43
      %s65 = sphi 0, %s67
      %s68 = sphi 0, %s65
      %s69 = sphi 0, %s68
      %s85 = sphi 0, %s69
      %s91 = sphi 0, %s93
      %s94 = sphi 0, %s91
      %s95 = sphi 0, %s94
      %s111 = sphi 0, %s95
    $region4: #{tpu_custom_call.1} parent=1 // loop_header_branch
      %18 = sbr.rel (%p16) target = $region8
    $region5: #{tpu_custom_call.1} parent=1 // loop_body
      %s20 = ssub.s32 %s15, 1
      %s21 = ssub.s32 %s15, 2
      %s28 = sadd.s32 1, %s23
      %p29 = scmp.ge.s32.totalorder %s28, 1
      %s30 = scalar_select %p29, 0, %s28
      %s31 = sadd.s32 1, %s22
      %s32 = scalar_select %p29, %s31, %s22
      %p33 = scmp.ge.s32.totalorder %s32, 2
      %s34 = scalar_select %p33, 0, %s32
      %s35 = ssub.s32 %s22, %s34
      %s36 = ssub.s32 %s23, %s30
      %s37 = sor.u32 %s35, %s36
      %p38 = scmp.eq.s32.totalorder %s37, 0
      %s40 = sadd.s32 %s39, 1
      %s41 = scalar_select %p38, %s39, %s40
      %p44 = pneg %p38
      %p45 = scmp.eq.s32.totalorder %s15, 1
      %p46 = por %p44, %p45
      %p47 = scmp.ne.s32.totalorder %s39, %s42
      %p48 = scmp.eq.s32.totalorder %s15, 0
      %p49 = por %p47, %p48
      %p50 = scmp.ne.s32.totalorder %s39, %s42
      %p51 = scmp.eq.s32.totalorder %s20, 1
      %p52 = por %p50, %p51
      %p53 = scmp.ne.s32.totalorder %s42, %s43
      %p54 = scmp.eq.s32.totalorder %s20, 0
      %p55 = por %p53, %p54
      %p56 = scmp.ne.s32.totalorder %s42, %s43
      %p57 = scmp.eq.s32.totalorder %s21, 1
      %p58 = por %p56, %p57
      %p60 = scmp.ne.s32.totalorder %s43, %s59
      %p61 = scmp.eq.s32.totalorder %s21, 0
      %p62 = por %p60, %p61
      %s63 = ssub.s32 %s23, %s30
      %p64 = scmp.eq.s32.totalorder %s63, 0
      %s66 = sadd.s32 %s65, 1
      %s67 = scalar_select %p64, %s65, %s66
      %p70 = pneg %p64
      %p71 = scmp.eq.s32.totalorder %s15, 1
      %p72 = por %p70, %p71
      %p73 = scmp.ne.s32.totalorder %s65, %s68
      %p74 = scmp.eq.s32.totalorder %s15, 0
      %p75 = por %p73, %p74
      %p76 = scmp.ne.s32.totalorder %s65, %s68
      %p77 = scmp.eq.s32.totalorder %s20, 1
      %p78 = por %p76, %p77
      %p79 = scmp.ne.s32.totalorder %s68, %s69
      %p80 = scmp.eq.s32.totalorder %s20, 0
      %p81 = por %p79, %p80
      %p82 = scmp.ne.s32.totalorder %s68, %s69
      %p83 = scmp.eq.s32.totalorder %s21, 1
      %p84 = por %p82, %p83
      %p86 = scmp.ne.s32.totalorder %s69, %s85
      %p87 = scmp.eq.s32.totalorder %s21, 0
      %p88 = por %p86, %p87
      %s89 = ssub.s32 %s22, %s34
      %p90 = scmp.eq.s32.totalorder %s89, 0
      %s92 = sadd.s32 %s91, 1
      %s93 = scalar_select %p90, %s91, %s92
      %p96 = pneg %p90
      %p97 = scmp.eq.s32.totalorder %s15, 1
      %p98 = por %p96, %p97
      %p99 = scmp.ne.s32.totalorder %s91, %s94
      %p100 = scmp.eq.s32.totalorder %s15, 0
      %p101 = por %p99, %p100
      %p102 = scmp.ne.s32.totalorder %s91, %s94
      %p103 = scmp.eq.s32.totalorder %s20, 1
      %p104 = por %p102, %p103
      %p105 = scmp.ne.s32.totalorder %s94, %s95
      %p106 = scmp.eq.s32.totalorder %s20, 0
      %p107 = por %p105, %p106
      %p108 = scmp.ne.s32.totalorder %s94, %s95
      %p109 = scmp.eq.s32.totalorder %s21, 1
      %p110 = por %p108, %p109
      %p112 = scmp.ne.s32.totalorder %s95, %s111
      %p113 = scmp.eq.s32.totalorder %s21, 0
      %p114 = por %p112, %p113
      %p115 = scmp.le.s32.totalorder 1, %s15
      %p116 = scmp.lt.s32.totalorder %s15, 3
      %p117 = pnand %p115, %p116
      %p118 = pneg %p117
      // Predicated region
      $region9: #{tpu_custom_call.1} parent=5 // pred_check
        _
      $region10: #{tpu_custom_call.1} parent=5 // pred_check_branch
        %120 = sbr.rel (%p117) target = $region12
      $region11: #{tpu_custom_call.1} parent=5 // pred_region
        %s121 = ssub.s32 %s15, 1
        // Predicated region
        $region13: #{tpu_custom_call.1} parent=11 // pred_check
          %p122 = pneg %p81
        $region14: #{tpu_custom_call.1} parent=11 // pred_check_branch
          %124 = sbr.rel (%p122) target = $region16
        $region15: #{tpu_custom_call.1} parent=11 // pred_region
          %s125 = smul.u32 32, %s25
          %s127 = ssub.s32 2048, 2048
          %128 = vsyncadd [#allocation7], %s127
          %s129 = smul.addr %s125, 64
          %s130 = scalar_lea.hbm %s1, %s129
          %s131 = sshll.u32 [#allocation6], 4
          %s132 = int_to_ptr.vmem [resolvable:$true] %s131
          %137 = dma.hbm_to_vmem [thread:$0]  %s130, 2048, %s132, [#allocation7], 64, 64, 4
        $region16: #{tpu_custom_call.1} parent=11 // pred_fallthru
          _
      $region12: #{tpu_custom_call.1} parent=5 // pred_fallthru
        _
      %p138 = scmp.lt.s32.totalorder %s15, 2
      // Predicated region
      $region17: #{tpu_custom_call.1} parent=5 // pred_check
        %p139 = pneg %p138
      $region18: #{tpu_custom_call.1} parent=5 // pred_check_branch
        %141 = sbr.rel (%p139) target = $region20
      $region19: #{tpu_custom_call.1} parent=5 // pred_region
        // Predicated region
        $region21: #{tpu_custom_call.1} parent=19 // pred_check
          %p142 = pneg %p49
        $region22: #{tpu_custom_call.1} parent=19 // pred_check_branch
          %144 = sbr.rel (%p142) target = $region24
        $region23: #{tpu_custom_call.1} parent=19 // pred_region
          %s145 = sand.u32 %s39, 1
          %s146 = scalar_lea.sflag [#allocation4], %s145
          %s147 = sand.u32 %s39, 1
          %s148 = smul.addr %s147, 128
          %s149 = scalar_lea.vmem [#allocation3], %s148
          %s150 = smul.u32 16, %s22
          %s151 = smul.u32 2, %s23
          %s153 = ssub.s32 2048, 2048
          %154 = vsyncadd %s146, %s153
          %s155 = smul.addr %s150, 2
          %s156 = sadd.s32 %s151, %s155
          %s157 = smul.addr %s156, 64
          %s158 = scalar_lea.hbm %s0, %s157
          %s159 = sshll.u32 %s149, 4
          %s160 = int_to_ptr.vmem [resolvable:$true] %s159
          %165 = dma.hbm_to_vmem [thread:$0]  %s158, 2048, %s160, %s146, 128, 128, 8
        $region24: #{tpu_custom_call.1} parent=19 // pred_fallthru
          _
      $region20: #{tpu_custom_call.1} parent=5 // pred_fallthru
        _
      %p166 = scmp.le.s32.totalorder 1, %s15
      %p167 = scmp.lt.s32.totalorder %s15, 3
      %p168 = pnand %p166, %p167
      %p169 = pneg %p168
      // Predicated region
      $region25: #{tpu_custom_call.1} parent=5 // pred_check
        _
      $region26: #{tpu_custom_call.1} parent=5 // pred_check_branch
        %171 = sbr.rel (%p168) target = $region28
      $region27: #{tpu_custom_call.1} parent=5 // pred_region
        %s172 = ssub.s32 %s15, 1
        %s173 = sand.u32 %s42, 1
        %s174 = scalar_lea.sflag [#allocation4], %s173
        %s175 = sand.u32 %s42, 1
        %s176 = smul.addr %s175, 128
        %s177 = scalar_lea.vmem [#allocation3], %s176
        // Predicated region
        $region29: #{tpu_custom_call.1} parent=27 // pred_check
          %p178 = pneg %p55
        $region30: #{tpu_custom_call.1} parent=27 // pred_check_branch
          %180 = sbr.rel (%p178) target = $region32
        $region31: #{tpu_custom_call.1} parent=27 // pred_region
          %181 = dma.done %s174, 2048
        $region32: #{tpu_custom_call.1} parent=27 // pred_fallthru
          _
        // Predicated region
        $region33: #{tpu_custom_call.1} parent=27 // pred_check
          %p182 = pneg %p81
        $region34: #{tpu_custom_call.1} parent=27 // pred_check_branch
          %184 = sbr.rel (%p182) target = $region36
        $region35: #{tpu_custom_call.1} parent=27 // pred_region
          %185 = dma.done [#allocation7], 2048
        $region36: #{tpu_custom_call.1} parent=27 // pred_fallthru
          _
        %s186 = sand.u32 %s42, 1
        %s187 = scalar_lea.sflag [#allocation4], %s186
        %s188 = sand.u32 %s42, 1
        %s189 = smul.addr %s188, 128
        %s190 = scalar_lea.vmem [#allocation3], %s189
        %p191 = pneg %p55
        %p192 = pneg %p52
        %p193 = pneg %p81
        %p194 = pneg %p78
        %p195 = pneg %p107
        %p196 = pneg %p104
        %s197 = sand.u32 %s94, 1
        %s198 = scalar_lea.sflag [#allocation5], %s197
        %s199 = sand.u32 %s94, 1
        %s200 = smul.addr %s199, 128
        %s201 = scalar_lea.vmem [#allocation8], %s200
        %s202 = smul.u32 16, %s24
        %s203 = smul.u32 2, %s25
        %s204 = smul.u32 32, %s25
        %s205 = smul.u32 16, %s24
        %p207 = scmp.eq.s32.totalorder %s25, 0
        // Predicated region
        $region37: #{tpu_custom_call.1} parent=27 // pred_check
          %p208 = pneg %p207
        $region38: #{tpu_custom_call.1} parent=27 // pred_check_branch
          %210 = sbr.rel (%p208) target = $region40
        $region39: #{tpu_custom_call.1} parent=27 // pred_region
          %211 = vst [vmem:[#allocation2] sm:$0xff] 0.0
          %212 = vst [vmem:[#allocation2 + $0x8] sm:$0xff] 0.0
          %213 = vst [vmem:[#allocation2 + $0x10] sm:$0xff] 0.0
          %214 = vst [vmem:[#allocation2 + $0x18] sm:$0xff] 0.0
          %215 = vst [vmem:[#allocation2 + $0x20] sm:$0xff] 0.0
          %216 = vst [vmem:[#allocation2 + $0x28] sm:$0xff] 0.0
          %217 = vst [vmem:[#allocation2 + $0x30] sm:$0xff] 0.0
          %218 = vst [vmem:[#allocation2 + $0x38] sm:$0xff] 0.0
          %219 = vst [vmem:[#allocation2 + $0x40] sm:$0xff] 0.0
          %220 = vst [vmem:[#allocation2 + $0x48] sm:$0xff] 0.0
          %221 = vst [vmem:[#allocation2 + $0x50] sm:$0xff] 0.0
          %222 = vst [vmem:[#allocation2 + $0x58] sm:$0xff] 0.0
          %223 = vst [vmem:[#allocation2 + $0x60] sm:$0xff] 0.0
          %224 = vst [vmem:[#allocation2 + $0x68] sm:$0xff] 0.0
          %225 = vst [vmem:[#allocation2 + $0x70] sm:$0xff] 0.0
          %226 = vst [vmem:[#allocation2 + $0x78] sm:$0xff] 0.0
        $region40: #{tpu_custom_call.1} parent=27 // pred_fallthru
          _
        %v227 = vld [vmem:[#allocation2] sm:$0xff]
        %v228 = vld [vmem:[#allocation2 + $0x8] sm:$0xff]
        %v229 = vld [vmem:[#allocation2 + $0x10] sm:$0xff]
        %v230 = vld [vmem:[#allocation2 + $0x18] sm:$0xff]
        %v231 = vld [vmem:[#allocation2 + $0x20] sm:$0xff]
        %v232 = vld [vmem:[#allocation2 + $0x28] sm:$0xff]
        %v233 = vld [vmem:[#allocation2 + $0x30] sm:$0xff]
        %v234 = vld [vmem:[#allocation2 + $0x38] sm:$0xff]
        %v235 = vld [vmem:[#allocation2 + $0x40] sm:$0xff]
        %v236 = vld [vmem:[#allocation2 + $0x48] sm:$0xff]
        %v237 = vld [vmem:[#allocation2 + $0x50] sm:$0xff]
        %v238 = vld [vmem:[#allocation2 + $0x58] sm:$0xff]
        %v239 = vld [vmem:[#allocation2 + $0x60] sm:$0xff]
        %v240 = vld [vmem:[#allocation2 + $0x68] sm:$0xff]
        %v241 = vld [vmem:[#allocation2 + $0x70] sm:$0xff]
        %v242 = vld [vmem:[#allocation2 + $0x78] sm:$0xff]
        %v243 = vld [vmem:[%s177] sm:$0xff]
        %v244 = vld [vmem:[%s177 + $0x8] sm:$0xff]
        %v245 = vld [vmem:[%s177 + $0x10] sm:$0xff]
        %v246 = vld [vmem:[%s177 + $0x18] sm:$0xff]
        %v247 = vld [vmem:[%s177 + $0x20] sm:$0xff]
        %v248 = vld [vmem:[%s177 + $0x28] sm:$0xff]
        %v249 = vld [vmem:[%s177 + $0x30] sm:$0xff]
        %v250 = vld [vmem:[%s177 + $0x38] sm:$0xff]
        %v251 = vld [vmem:[%s177 + $0x40] sm:$0xff]
        %v252 = vld [vmem:[%s177 + $0x48] sm:$0xff]
        %v253 = vld [vmem:[%s177 + $0x50] sm:$0xff]
        %v254 = vld [vmem:[%s177 + $0x58] sm:$0xff]
        %v255 = vld [vmem:[%s177 + $0x60] sm:$0xff]
        %v256 = vld [vmem:[%s177 + $0x68] sm:$0xff]
        %v257 = vld [vmem:[%s177 + $0x70] sm:$0xff]
        %v258 = vld [vmem:[%s177 + $0x78] sm:$0xff]
        %v259 = vld [vmem:[#allocation6] sm:$0xf]
        %v260 = vld [vmem:[#allocation6 + $0x4] sm:$0xf]
        %v261 = vld [vmem:[#allocation6 + $0x8] sm:$0xf]
        %v262 = vld [vmem:[#allocation6 + $0xc] sm:$0xf]
        %v263 = vld [vmem:[#allocation6 + $0x10] sm:$0xf]
        %v264 = vld [vmem:[#allocation6 + $0x14] sm:$0xf]
        %v265 = vld [vmem:[#allocation6 + $0x18] sm:$0xf]
        %v266 = vld [vmem:[#allocation6 + $0x1c] sm:$0xf]
        %v267 = vld [vmem:[#allocation6 + $0x20] sm:$0xf]
        %v268 = vld [vmem:[#allocation6 + $0x24] sm:$0xf]
        %v269 = vld [vmem:[#allocation6 + $0x28] sm:$0xf]
        %v270 = vld [vmem:[#allocation6 + $0x2c] sm:$0xf]
        %v271 = vld [vmem:[#allocation6 + $0x30] sm:$0xf]
        %v272 = vld [vmem:[#allocation6 + $0x34] sm:$0xf]
        %v273 = vld [vmem:[#allocation6 + $0x38] sm:$0xf]
        %v274 = vld [vmem:[#allocation6 + $0x3c] sm:$0xf]
        %v275 = vld [vmem:[#allocation6 + $0x40] sm:$0xf]
        %v276 = vld [vmem:[#allocation6 + $0x44] sm:$0xf]
        %v277 = vld [vmem:[#allocation6 + $0x48] sm:$0xf]
        %v278 = vld [vmem:[#allocation6 + $0x4c] sm:$0xf]
        %v279 = vld [vmem:[#allocation6 + $0x50] sm:$0xf]
        %v280 = vld [vmem:[#allocation6 + $0x54] sm:$0xf]
        %v281 = vld [vmem:[#allocation6 + $0x58] sm:$0xf]
        %v282 = vld [vmem:[#allocation6 + $0x5c] sm:$0xf]
        %v283 = vld [vmem:[#allocation6 + $0x60] sm:$0xf]
        %v284 = vld [vmem:[#allocation6 + $0x64] sm:$0xf]
        %v285 = vld [vmem:[#allocation6 + $0x68] sm:$0xf]
        %v286 = vld [vmem:[#allocation6 + $0x6c] sm:$0xf]
        %v287 = vld [vmem:[#allocation6 + $0x70] sm:$0xf]
        %v288 = vld [vmem:[#allocation6 + $0x74] sm:$0xf]
        %v289 = vld [vmem:[#allocation6 + $0x78] sm:$0xf]
        %v290 = vld [vmem:[#allocation6 + $0x7c] sm:$0xf]
        %v307 = vunpack.c.l.b16 %v243
        %v308 = vunpack.c.h.b16 %v243
        %v309 = vunpack.c.l.b16 %v244
        %v310 = vunpack.c.h.b16 %v244
        %v311 = vunpack.c.l.b16 %v245
        %v312 = vunpack.c.h.b16 %v245
        %v313 = vunpack.c.l.b16 %v246
        %v314 = vunpack.c.h.b16 %v246
        %v315 = vunpack.c.l.b16 %v247
        %v316 = vunpack.c.h.b16 %v247
        %v317 = vunpack.c.l.b16 %v248
        %v318 = vunpack.c.h.b16 %v248
        %v319 = vunpack.c.l.b16 %v249
        %v320 = vunpack.c.h.b16 %v249
        %v321 = vunpack.c.l.b16 %v250
        %v322 = vunpack.c.h.b16 %v250
        %v323 = vunpack.c.l.b16 %v251
        %v324 = vunpack.c.h.b16 %v251
        %v325 = vunpack.c.l.b16 %v252
        %v326 = vunpack.c.h.b16 %v252
        %v327 = vunpack.c.l.b16 %v253
        %v328 = vunpack.c.h.b16 %v253
        %v329 = vunpack.c.l.b16 %v254
        %v330 = vunpack.c.h.b16 %v254
        %v331 = vunpack.c.l.b16 %v255
        %v332 = vunpack.c.h.b16 %v255
        %v333 = vunpack.c.l.b16 %v256
        %v334 = vunpack.c.h.b16 %v256
        %v335 = vunpack.c.l.b16 %v257
        %v336 = vunpack.c.h.b16 %v257
        %v337 = vunpack.c.l.b16 %v258
        %v338 = vunpack.c.h.b16 %v258
        %v339 = vpack.c.b16 %v309, %v307
        %v340 = vpack.c.b16 %v310, %v308
        %v341 = vpack.c.b16 %v313, %v311
        %v342 = vpack.c.b16 %v314, %v312
        %v343 = vpack.c.b16 %v317, %v315
        %v344 = vpack.c.b16 %v318, %v316
        %v345 = vpack.c.b16 %v321, %v319
        %v346 = vpack.c.b16 %v322, %v320
        %v347 = vpack.c.b16 %v325, %v323
        %v348 = vpack.c.b16 %v326, %v324
        %v349 = vpack.c.b16 %v329, %v327
        %v350 = vpack.c.b16 %v330, %v328
        %v351 = vpack.c.b16 %v333, %v331
        %v352 = vpack.c.b16 %v334, %v332
        %v353 = vpack.c.b16 %v337, %v335
        %v354 = vpack.c.b16 %v338, %v336
        %v403 = vunpack.c.l.b16 %v259
        %v404 = vunpack.c.l.b16 %v260
        %v405 = vunpack.c.l.b16 %v261
        %v406 = vunpack.c.l.b16 %v262
        %v407 = vunpack.c.l.b16 %v263
        %v408 = vunpack.c.l.b16 %v264
        %v409 = vunpack.c.l.b16 %v265
        %v410 = vunpack.c.l.b16 %v266
        %v411 = vunpack.c.l.b16 %v267
        %v412 = vunpack.c.l.b16 %v268
        %v413 = vunpack.c.l.b16 %v269
        %v414 = vunpack.c.l.b16 %v270
        %v415 = vunpack.c.l.b16 %v271
        %v416 = vunpack.c.l.b16 %v272
        %v417 = vunpack.c.l.b16 %v273
        %v418 = vunpack.c.l.b16 %v274
        %v419 = vunpack.c.l.b16 %v275
        %v420 = vunpack.c.l.b16 %v276
        %v421 = vunpack.c.l.b16 %v277
        %v422 = vunpack.c.l.b16 %v278
        %v423 = vunpack.c.l.b16 %v279
        %v424 = vunpack.c.l.b16 %v280
        %v425 = vunpack.c.l.b16 %v281
        %v426 = vunpack.c.l.b16 %v282
        %v427 = vunpack.c.l.b16 %v283
        %v428 = vunpack.c.l.b16 %v284
        %v429 = vunpack.c.l.b16 %v285
        %v430 = vunpack.c.l.b16 %v286
        %v431 = vunpack.c.l.b16 %v287
        %v432 = vunpack.c.l.b16 %v288
        %v433 = vunpack.c.l.b16 %v289
        %v434 = vunpack.c.l.b16 %v290
        %v435 = vpack.c.b16 %v404, %v403
        %v436 = vpack.c.b16 %v406, %v405
        %v437 = vpack.c.b16 %v408, %v407
        %v438 = vpack.c.b16 %v410, %v409
        %v439 = vpack.c.b16 %v412, %v411
        %v440 = vpack.c.b16 %v414, %v413
        %v441 = vpack.c.b16 %v416, %v415
        %v442 = vpack.c.b16 %v418, %v417
        %v443 = vpack.c.b16 %v420, %v419
        %v444 = vpack.c.b16 %v422, %v421
        %v445 = vpack.c.b16 %v424, %v423
        %v446 = vpack.c.b16 %v426, %v425
        %v447 = vpack.c.b16 %v428, %v427
        %v448 = vpack.c.b16 %v430, %v429
        %v449 = vpack.c.b16 %v432, %v431
        %v450 = vpack.c.b16 %v434, %v433
        %467 = vmatprep.subr.bf16.mxu0 0
        %468 = vmatpush1.bf16.msra.mxu0 %v442
        %469 = vmatprep.subr.bf16.mxu0 0
        %470 = vmatpush1.bf16.msra.mxu0 %v441
        %471 = vmatprep.subr.bf16.mxu0 0
        %472 = vmatpush1.bf16.msra.mxu0 %v440
        %473 = vmatprep.subr.bf16.mxu0 0
        %474 = vmatpush1.bf16.msra.mxu0 %v439
        %475 = vmatprep.subr.bf16.mxu0 0
        %476 = vmatpush1.bf16.msra.mxu0 %v438
        %477 = vmatprep.subr.bf16.mxu0 0
        %478 = vmatpush1.bf16.msra.mxu0 %v437
        %479 = vmatprep.subr.bf16.mxu0 0
        %480 = vmatpush1.bf16.msra.mxu0 %v436
        %481 = vmatprep.subr.bf16.mxu0 0
        %482 = vmatpush1.bf16.msra.mxu0 %v435
        %483 = vmatprep.subr.bf16.mxu0 0
        %484 = vmatpush2.bf16.msra.mxu0 %v450
        %485 = vmatprep.subr.bf16.mxu0 0
        %486 = vmatpush2.bf16.msra.mxu0 %v449
        %487 = vmatprep.subr.bf16.mxu0 0
        %488 = vmatpush2.bf16.msra.mxu0 %v448
        %489 = vmatprep.subr.bf16.mxu0 0
        %490 = vmatpush2.bf16.msra.mxu0 %v447
        %491 = vmatprep.subr.bf16.mxu0 0
        %492 = vmatpush2.bf16.msra.mxu0 %v446
        %493 = vmatprep.subr.bf16.mxu0 0
        %494 = vmatpush2.bf16.msra.mxu0 %v445
        %495 = vmatprep.subr.bf16.mxu0 0
        %496 = vmatpush2.bf16.msra.mxu0 %v444
        %497 = vmatprep.subr.bf16.mxu0 0
        %498 = vmatpush2.bf16.msra.mxu0 %v443
        %499 = vmatprep.mubr.bf16.mxu0 %v340
        %500 = vmatmul.mubr.bf16.gmra.mxu0 %v339
        %v501 = vpop.f32.mrf.mxu0
        %v502 = vadd.f32 0.0, %v501
        %v503 = vpop.f32.mrf.mxu0
        %v504 = vpop.f32.mrf.mxu0
        %v505 = vadd.f32 0.0, %v504
        %v506 = vpop.f32.mrf.mxu0
        %507 = vmatprep.mubr.bf16.mxu0 %v342
        %508 = vmatmul.mubr.bf16.gmra.mxu0 %v341
        %v509 = vpop.f32.mrf.mxu0
        %v510 = vadd.f32 0.0, %v509
        %v511 = vpop.f32.mrf.mxu0
        %v512 = vpop.f32.mrf.mxu0
        %v513 = vadd.f32 0.0, %v512
        %v514 = vpop.f32.mrf.mxu0
        %515 = vmatprep.mubr.bf16.mxu0 %v344
        %516 = vmatmul.mubr.bf16.gmra.mxu0 %v343
        %v517 = vpop.f32.mrf.mxu0
        %v518 = vadd.f32 0.0, %v517
        %v519 = vpop.f32.mrf.mxu0
        %v520 = vpop.f32.mrf.mxu0
        %v521 = vadd.f32 0.0, %v520
        %v522 = vpop.f32.mrf.mxu0
        %523 = vmatprep.mubr.bf16.mxu0 %v346
        %524 = vmatmul.mubr.bf16.gmra.mxu0 %v345
        %v525 = vpop.f32.mrf.mxu0
        %v526 = vadd.f32 0.0, %v525
        %v527 = vpop.f32.mrf.mxu0
        %v528 = vpop.f32.mrf.mxu0
        %v529 = vadd.f32 0.0, %v528
        %v530 = vpop.f32.mrf.mxu0
        %531 = vmatprep.mubr.bf16.mxu0 %v348
        %532 = vmatmul.mubr.bf16.gmra.mxu0 %v347
        %v533 = vpop.f32.mrf.mxu0
        %v534 = vadd.f32 0.0, %v533
        %v535 = vpop.f32.mrf.mxu0
        %v536 = vpop.f32.mrf.mxu0
        %v537 = vadd.f32 0.0, %v536
        %v538 = vpop.f32.mrf.mxu0
        %539 = vmatprep.mubr.bf16.mxu0 %v350
        %540 = vmatmul.mubr.bf16.gmra.mxu0 %v349
        %v541 = vpop.f32.mrf.mxu0
        %v542 = vadd.f32 0.0, %v541
        %v543 = vpop.f32.mrf.mxu0
        %v544 = vpop.f32.mrf.mxu0
        %v545 = vadd.f32 0.0, %v544
        %v546 = vpop.f32.mrf.mxu0
        %547 = vmatprep.mubr.bf16.mxu0 %v352
        %548 = vmatmul.mubr.bf16.gmra.mxu0 %v351
        %v549 = vpop.f32.mrf.mxu0
        %v550 = vadd.f32 0.0, %v549
        %v551 = vpop.f32.mrf.mxu0
        %v552 = vpop.f32.mrf.mxu0
        %v553 = vadd.f32 0.0, %v552
        %v554 = vpop.f32.mrf.mxu0
        %555 = vmatprep.mubr.bf16.mxu0 %v354
        %556 = vmatmul.mubr.bf16.gmra.mxu0 %v353
        %v557 = vpop.f32.mrf.mxu0
        %v558 = vadd.f32 0.0, %v557
        %v559 = vpop.f32.mrf.mxu0
        %v560 = vpop.f32.mrf.mxu0
        %v561 = vadd.f32 0.0, %v560
        %v562 = vpop.f32.mrf.mxu0
        %563 = vdwg.mxu0
        %v564 = vadd.f32 %v227, %v502
        %v565 = vadd.f32 %v228, %v505
        %v566 = vadd.f32 %v229, %v510
        %v567 = vadd.f32 %v230, %v513
        %v568 = vadd.f32 %v231, %v518
        %v569 = vadd.f32 %v232, %v521
        %v570 = vadd.f32 %v233, %v526
        %v571 = vadd.f32 %v234, %v529
        %v572 = vadd.f32 %v235, %v534
        %v573 = vadd.f32 %v236, %v537
        %v574 = vadd.f32 %v237, %v542
        %v575 = vadd.f32 %v238, %v545
        %v576 = vadd.f32 %v239, %v550
        %v577 = vadd.f32 %v240, %v553
        %v578 = vadd.f32 %v241, %v558
        %v579 = vadd.f32 %v242, %v561
        %580 = vst [vmem:[#allocation2] sm:$0xff] %v564
        %581 = vst [vmem:[#allocation2 + $0x8] sm:$0xff] %v565
        %582 = vst [vmem:[#allocation2 + $0x10] sm:$0xff] %v566
        %583 = vst [vmem:[#allocation2 + $0x18] sm:$0xff] %v567
        %584 = vst [vmem:[#allocation2 + $0x20] sm:$0xff] %v568
        %585 = vst [vmem:[#allocation2 + $0x28] sm:$0xff] %v569
        %586 = vst [vmem:[#allocation2 + $0x30] sm:$0xff] %v570
        %587 = vst [vmem:[#allocation2 + $0x38] sm:$0xff] %v571
        %588 = vst [vmem:[#allocation2 + $0x40] sm:$0xff] %v572
        %589 = vst [vmem:[#allocation2 + $0x48] sm:$0xff] %v573
        %590 = vst [vmem:[#allocation2 + $0x50] sm:$0xff] %v574
        %591 = vst [vmem:[#allocation2 + $0x58] sm:$0xff] %v575
        %592 = vst [vmem:[#allocation2 + $0x60] sm:$0xff] %v576
        %593 = vst [vmem:[#allocation2 + $0x68] sm:$0xff] %v577
        %594 = vst [vmem:[#allocation2 + $0x70] sm:$0xff] %v578
        %595 = vst [vmem:[#allocation2 + $0x78] sm:$0xff] %v579
        // Predicated region
        $region41: #{tpu_custom_call.1} parent=27 // pred_check
          %p596 = pneg %p207
        $region42: #{tpu_custom_call.1} parent=27 // pred_check_branch
          %598 = sbr.rel (%p596) target = $region44
        $region43: #{tpu_custom_call.1} parent=27 // pred_region
          %v599 = vld [vmem:[#allocation2] sm:$0xff]
          %v600 = vld [vmem:[#allocation2 + $0x8] sm:$0xff]
          %v601 = vld [vmem:[#allocation2 + $0x10] sm:$0xff]
          %v602 = vld [vmem:[#allocation2 + $0x18] sm:$0xff]
          %v603 = vld [vmem:[#allocation2 + $0x20] sm:$0xff]
          %v604 = vld [vmem:[#allocation2 + $0x28] sm:$0xff]
          %v605 = vld [vmem:[#allocation2 + $0x30] sm:$0xff]
          %v606 = vld [vmem:[#allocation2 + $0x38] sm:$0xff]
          %v607 = vld [vmem:[#allocation2 + $0x40] sm:$0xff]
          %v608 = vld [vmem:[#allocation2 + $0x48] sm:$0xff]
          %v609 = vld [vmem:[#allocation2 + $0x50] sm:$0xff]
          %v610 = vld [vmem:[#allocation2 + $0x58] sm:$0xff]
          %v611 = vld [vmem:[#allocation2 + $0x60] sm:$0xff]
          %v612 = vld [vmem:[#allocation2 + $0x68] sm:$0xff]
          %v613 = vld [vmem:[#allocation2 + $0x70] sm:$0xff]
          %v614 = vld [vmem:[#allocation2 + $0x78] sm:$0xff]
          %v615 = vmax.f32 %v599, 0.0
          %v616 = vmax.f32 %v600, 0.0
          %v617 = vmax.f32 %v601, 0.0
          %v618 = vmax.f32 %v602, 0.0
          %v619 = vmax.f32 %v603, 0.0
          %v620 = vmax.f32 %v604, 0.0
          %v621 = vmax.f32 %v605, 0.0
          %v622 = vmax.f32 %v606, 0.0
          %v623 = vmax.f32 %v607, 0.0
          %v624 = vmax.f32 %v608, 0.0
          %v625 = vmax.f32 %v609, 0.0
          %v626 = vmax.f32 %v610, 0.0
          %v627 = vmax.f32 %v611, 0.0
          %v628 = vmax.f32 %v612, 0.0
          %v629 = vmax.f32 %v613, 0.0
          %v630 = vmax.f32 %v614, 0.0
          %631 = vst [vmem:[%s201] sm:$0xff] %v615
          %632 = vst [vmem:[%s201 + $0x8] sm:$0xff] %v616
          %633 = vst [vmem:[%s201 + $0x10] sm:$0xff] %v617
          %634 = vst [vmem:[%s201 + $0x18] sm:$0xff] %v618
          %635 = vst [vmem:[%s201 + $0x20] sm:$0xff] %v619
          %636 = vst [vmem:[%s201 + $0x28] sm:$0xff] %v620
          %637 = vst [vmem:[%s201 + $0x30] sm:$0xff] %v621
          %638 = vst [vmem:[%s201 + $0x38] sm:$0xff] %v622
          %639 = vst [vmem:[%s201 + $0x40] sm:$0xff] %v623
          %640 = vst [vmem:[%s201 + $0x48] sm:$0xff] %v624
          %641 = vst [vmem:[%s201 + $0x50] sm:$0xff] %v625
          %642 = vst [vmem:[%s201 + $0x58] sm:$0xff] %v626
          %643 = vst [vmem:[%s201 + $0x60] sm:$0xff] %v627
          %644 = vst [vmem:[%s201 + $0x68] sm:$0xff] %v628
          %645 = vst [vmem:[%s201 + $0x70] sm:$0xff] %v629
          %646 = vst [vmem:[%s201 + $0x78] sm:$0xff] %v630
        $region44: #{tpu_custom_call.1} parent=27 // pred_fallthru
          _
        %s647 = sand.u32 %s94, 1
        %s648 = scalar_lea.sflag [#allocation5], %s647
        %s649 = sand.u32 %s94, 1
        %s650 = smul.addr %s649, 128
        %s651 = scalar_lea.vmem [#allocation8], %s650
        // Predicated region
        $region45: #{tpu_custom_call.1} parent=27 // pred_check
          %p652 = pneg %p104
        $region46: #{tpu_custom_call.1} parent=27 // pred_check_branch
          %654 = sbr.rel (%p652) target = $region48
        $region47: #{tpu_custom_call.1} parent=27 // pred_region
          %s655 = smul.u32 16, %s24
          %s657 = ssub.s32 2048, 2048
          %658 = vsyncadd %s648, %s657
          %s659 = smul.addr %s655, 128
          %s660 = scalar_lea.hbm %s2, %s659
          %s661 = sshll.u32 %s651, 4
          %s662 = int_to_ptr.vmem [resolvable:$true] %s661
          %667 = dma.vmem_to_hbm [thread:$0]  %s662, 2048, %s660, %s648, 128, 128, 8
        $region48: #{tpu_custom_call.1} parent=27 // pred_fallthru
          _
      $region28: #{tpu_custom_call.1} parent=5 // pred_fallthru
        _
      %p668 = scmp.le.s32.totalorder 2, %s15
      // Predicated region
      $region49: #{tpu_custom_call.1} parent=5 // pred_check
        %p669 = pneg %p668
      $region50: #{tpu_custom_call.1} parent=5 // pred_check_branch
        %671 = sbr.rel (%p669) target = $region52
      $region51: #{tpu_custom_call.1} parent=5 // pred_region
        %s672 = ssub.s32 %s15, 2
        // Predicated region
        $region53: #{tpu_custom_call.1} parent=51 // pred_check
          %p673 = pneg %p110
        $region54: #{tpu_custom_call.1} parent=51 // pred_check_branch
          %675 = sbr.rel (%p673) target = $region56
        $region55: #{tpu_custom_call.1} parent=51 // pred_region
          %s676 = sand.u32 %s95, 1
          %s677 = scalar_lea.sflag [#allocation5], %s676
          %s678 = sand.u32 %s95, 1
          %s679 = smul.addr %s678, 128
          %s680 = scalar_lea.vmem [#allocation8], %s679
          %681 = dma.done %s677, 2048
        $region56: #{tpu_custom_call.1} parent=51 // pred_fallthru
          _
      $region52: #{tpu_custom_call.1} parent=5 // pred_fallthru
        _
    $region6: #{tpu_custom_call.1} parent=1 // loop_footer
      %s19 = sadd.s32 1, %s15
    $region7: #{tpu_custom_call.1} parent=1 // loop_footer_branch
      %14 = sbr.rel target = $region3
    $region8: #{tpu_custom_call.1} parent=1 // loop_exit
      _
    %682 = vsyncpa [#allocation4], 1
    %s683 = scalar_lea.sflag [#allocation4], 1
    %684 = vsyncpa %s683, 1
    %685 = vsyncpa [#allocation7], 1
    %686 = vsyncpa [#allocation5], 1
    %s687 = scalar_lea.sflag [#allocation5], 1
    %688 = vsyncpa %s687, 1

</llo_original>
